<compile_context>
chip_gen: v5e
topology: v5e:2x2
jax: 0.10.0
libtpu: 0.0.40
codegen_flags: <defaults>
</compile_context>

<pallas_src>
import functools

import jax
import jax.numpy as jnp
from jax.experimental import pallas as pl
from jax.experimental.pallas import tpu as pltpu


# --------------------- fused GRU + Flatten + Linear kernel -------------------
def fused_gru_fc_kernel(x_ref, wih_ref, whh_ref, b_i_ref, b_hn_ref,
                        fcw_ref, fcb_ref, out_ref, hid_ref):
    TB, D = x_ref.shape                       # (T*B, D), time-major rows
    H = whh_ref.shape[0]
    B, O = out_ref.shape
    T = TB // B

    # ---- hoisted input-side GEMM + single fused bias add (off the chain) ---
    # i_all[:, :2H] already contains b_ih[r,z]+b_hh[r,z]; i_all[:, 2H:] has b_ih[n].
    i_all = jnp.dot(x_ref[...], wih_ref[...],
                    preferred_element_type=jnp.float32) + b_i_ref[...]   # (T*B, 3H)

    w_hh = whh_ref[...]                                        # (H, 3H), resident
    b_hn = jnp.broadcast_to(b_hn_ref[...], (B, H))             # hoisted broadcast
    out_acc = jnp.broadcast_to(fcb_ref[...], (B, O))           # start from fc bias

    h = jnp.zeros((B, H), jnp.float32)                         # h0 = zeros
    # T is small & static: fully unrolled recurrence. The only serial work per
    # step is ONE fused (B,H)@(H,3H) matmul + VPU/EUP gate math; the per-step
    # FC matmul below is off the dependency chain and overlaps with step t+1.
    for t in range(T):
        i_t = i_all[t * B:(t + 1) * B]                         # (B, 3H) static slice
        g_h = jnp.dot(h, w_hh, preferred_element_type=jnp.float32)   # (B, 3H)
        rz = jax.nn.sigmoid(i_t[:, :2 * H] + g_h[:, :2 * H])
        r = rz[:, :H]
        z = rz[:, H:]
        n = jnp.tanh(i_t[:, 2 * H:] + r * (g_h[:, 2 * H:] + b_hn))
        h = (1.0 - z) * n + z * h
        # fused Flatten+Linear: accumulate this step's FC contribution now
        out_acc = out_acc + jnp.dot(h, fcw_ref[t * H:(t + 1) * H, :],
                                    preferred_element_type=jnp.float32)

    out_ref[...] = out_acc.astype(out_ref.dtype)
    hid_ref[...] = h.astype(hid_ref.dtype)                     # lane-dense (B, H)


# ------------------------------ model wrapper --------------------------------
@functools.partial(jax.jit)
def neural_network_forward(x, params):
    B, T, D = x.shape
    H = params["w_hh"].shape[0]
    O = params["fc_w"].shape[-1]

    # time-major, 2D lane-friendly slab; all layout plumbing stays in XLA
    x2d = jnp.transpose(x, (1, 0, 2)).reshape(T * B, D)        # (T*B, D)
    # fused input-side bias: [ b_ih[r,z]+b_hh[r,z] | b_ih[n] ]  -> (1, 3H)
    b_i = jnp.concatenate(
        [params["b_ih"][:, :2 * H] + params["b_hh"][:, :2 * H],
         params["b_ih"][:, 2 * H:]], axis=-1)
    b_hn = params["b_hh"][:, 2 * H:]                           # (1, H)

    grid_spec = pltpu.PrefetchScalarGridSpec(
        num_scalar_prefetch=0,
        grid=(1,),                              # single invocation, all-resident
        in_specs=[
            pl.BlockSpec((T * B, D), lambda i: (0, 0)),
            pl.BlockSpec((D, 3 * H), lambda i: (0, 0)),
            pl.BlockSpec((H, 3 * H), lambda i: (0, 0)),
            pl.BlockSpec((1, 3 * H), lambda i: (0, 0)),
            pl.BlockSpec((1, H), lambda i: (0, 0)),
            pl.BlockSpec((T * H, O), lambda i: (0, 0)),
            pl.BlockSpec((1, O), lambda i: (0, 0)),
        ],
        out_specs=[
            pl.BlockSpec((B, O), lambda i: (0, 0)),
            pl.BlockSpec((B, H), lambda i: (0, 0)),
        ],
    )
    out, hid = pl.pallas_call(
        fused_gru_fc_kernel,
        out_shape=(jax.ShapeDtypeStruct((B, O), jnp.float32),
                   jax.ShapeDtypeStruct((B, H), jnp.float32)),
        grid_spec=grid_spec,
        compiler_params=pltpu.CompilerParams(
            dimension_semantics=("arbitrary",)),
    )(x2d, params["w_ih"], params["w_hh"], b_i, b_hn,
      params["fc_w"], params["fc_b"])
    return out, hid[None]                       # hidden: (1, B, H), num_layers=1


def init_params(key, data_size, seq_len, hidden_size, output_size):
    ks = jax.random.split(key, 6)
    bound_gru = 1.0 / jnp.sqrt(hidden_size)
    bound_fc = 1.0 / jnp.sqrt(hidden_size * seq_len)
    u = lambda k, shape, b: jax.random.uniform(k, shape, jnp.float32, -b, b)
    return {
        # fused gate layout, columns ordered [r | z | n] (PyTorch order)
        "w_ih": u(ks[0], (data_size, 3 * hidden_size), bound_gru),
        "w_hh": u(ks[1], (hidden_size, 3 * hidden_size), bound_gru),
        "b_ih": u(ks[2], (1, 3 * hidden_size), bound_gru),
        "b_hh": u(ks[3], (1, 3 * hidden_size), bound_gru),
        "fc_w": u(ks[4], (hidden_size * seq_len, output_size), bound_fc),
        "fc_b": u(ks[5], (1, output_size), bound_fc),
    }


# ----------------------------- pure-JAX reference ----------------------------
def reference_forward(x, p):
    B, T, D = x.shape
    H = p["w_hh"].shape[0]
    h = jnp.zeros((B, H), jnp.float32)
    outs = []
    for t in range(T):
        xt = x[:, t, :]
        gi = xt @ p["w_ih"] + p["b_ih"]        # (B, 3H)
        gh = h @ p["w_hh"] + p["b_hh"]         # (B, 3H)
        r = jax.nn.sigmoid(gi[:, :H] + gh[:, :H])
        z = jax.nn.sigmoid(gi[:, H:2 * H] + gh[:, H:2 * H])
        n = jnp.tanh(gi[:, 2 * H:] + r * gh[:, 2 * H:])
        h = (1.0 - z) * n + z * h
        outs.append(h)
    out_seq = jnp.stack(outs, axis=1)          # (B, T, H)
    out = out_seq.reshape(B, -1) @ p["fc_w"] + p["fc_b"]
    return out, h[None]


if __name__ == "__main__":
    # small shapes consistent with the module's forward
    batch, seq_len, data_size, hidden_size, output_size = 4, 8, 14, 32, 1

    key = jax.random.PRNGKey(0)
    kx, kp = jax.random.split(key)
    x = jax.random.normal(kx, (batch, seq_len, data_size), jnp.float32)
    params = init_params(kp, data_size, seq_len, hidden_size, output_size)

    out, hidden = neural_network_forward(x, params)
    jax.block_until_ready((out, hidden))

    ref_out, ref_hidden = reference_forward(x, params)
    assert out.shape == (batch, output_size)
    assert hidden.shape == (1, batch, hidden_size)
    assert jnp.allclose(out, ref_out, atol=1e-4, rtol=1e-4)
    assert jnp.allclose(hidden, ref_hidden, atol=1e-4, rtol=1e-4)

    print("KERNEL_OK")
</pallas_src>

<mosaic_0001>
module attributes {stable_mosaic.version = 11 : i64} {
  func.func @fused_gru_fc_kernel(%arg0: i32, %arg1: memref<32x14xf32, #tpu.memory_space<vmem>>, %arg2: memref<14x96xf32, #tpu.memory_space<vmem>>, %arg3: memref<32x96xf32, #tpu.memory_space<vmem>>, %arg4: memref<1x96xf32, #tpu.memory_space<vmem>>, %arg5: memref<1x32xf32, #tpu.memory_space<vmem>>, %arg6: memref<256x1xf32, #tpu.memory_space<vmem>>, %arg7: memref<1x1xf32, #tpu.memory_space<vmem>>, %arg8: memref<4x1xf32, #tpu.memory_space<vmem>>, %arg9: memref<4x32xf32, #tpu.memory_space<vmem>>) attributes {dimension_semantics = [#tpu.dimension_semantics<arbitrary>], iteration_bounds = array<i64: 1>, scalar_prefetch = 0 : i64, scratch_operands = 0 : i64, tpu.core_type = #tpu.core_type<tc>, window_params = [{pipeline_mode = #tpu.pipeline_mode<synchronous>, transform_indices = @transform_0, window_bounds = array<i64: 32, 14>}, {pipeline_mode = #tpu.pipeline_mode<synchronous>, transform_indices = @transform_1, window_bounds = array<i64: 14, 96>}, {pipeline_mode = #tpu.pipeline_mode<synchronous>, transform_indices = @transform_2, window_bounds = array<i64: 32, 96>}, {pipeline_mode = #tpu.pipeline_mode<synchronous>, transform_indices = @transform_3, window_bounds = array<i64: 1, 96>}, {pipeline_mode = #tpu.pipeline_mode<synchronous>, transform_indices = @transform_4, window_bounds = array<i64: 1, 32>}, {pipeline_mode = #tpu.pipeline_mode<synchronous>, transform_indices = @transform_5, window_bounds = array<i64: 256, 1>}, {pipeline_mode = #tpu.pipeline_mode<synchronous>, transform_indices = @transform_6, window_bounds = array<i64: 1, 1>}, {pipeline_mode = #tpu.pipeline_mode<synchronous>, transform_indices = @transform_7, window_bounds = array<i64: 4, 1>}, {pipeline_mode = #tpu.pipeline_mode<synchronous>, transform_indices = @transform_8, window_bounds = array<i64: 4, 32>}]} {
    %c0 = arith.constant 0 : index
    %c0_0 = arith.constant 0 : index
    %0 = vector.load %arg1[%c0, %c0_0] : memref<32x14xf32, #tpu.memory_space<vmem>>, vector<32x14xf32>
    %c0_1 = arith.constant 0 : index
    %c0_2 = arith.constant 0 : index
    %1 = vector.load %arg2[%c0_1, %c0_2] : memref<14x96xf32, #tpu.memory_space<vmem>>, vector<14x96xf32>
    %cst = arith.constant dense<0.000000e+00> : vector<32x96xf32>
    %2 = tpu.matmul %0, %1, %cst {dimension_numbers = #tpu.dot_dimension_numbers<[1], [0], [0], [1], [0, 0, 1, 1], [], []>} : vector<32x14xf32>, vector<14x96xf32>, vector<32x96xf32> -> vector<32x96xf32>
    %c0_3 = arith.constant 0 : index
    %c0_4 = arith.constant 0 : index
    %3 = vector.load %arg4[%c0_3, %c0_4] : memref<1x96xf32, #tpu.memory_space<vmem>>, vector<1x96xf32>
    %4 = vector.broadcast %3 : vector<1x96xf32> to vector<32x96xf32>
    %5 = arith.addf %2, %4 : vector<32x96xf32>
    %c0_5 = arith.constant 0 : index
    %c0_6 = arith.constant 0 : index
    %6 = vector.load %arg3[%c0_5, %c0_6] : memref<32x96xf32, #tpu.memory_space<vmem>>, vector<32x96xf32>
    %c0_7 = arith.constant 0 : index
    %c0_8 = arith.constant 0 : index
    %7 = vector.load %arg5[%c0_7, %c0_8] : memref<1x32xf32, #tpu.memory_space<vmem>>, vector<1x32xf32>
    %8 = vector.shape_cast %7 : vector<1x32xf32> to vector<1x32xf32>
    %9 = vector.broadcast %8 : vector<1x32xf32> to vector<4x32xf32>
    %c0_9 = arith.constant 0 : index
    %c0_10 = arith.constant 0 : index
    %10 = vector.load %arg7[%c0_9, %c0_10] : memref<1x1xf32, #tpu.memory_space<vmem>>, vector<1x1xf32>
    %11 = vector.shape_cast %10 : vector<1x1xf32> to vector<1x1xf32>
    %12 = vector.broadcast %11 : vector<1x1xf32> to vector<4x1xf32>
    %cst_11 = arith.constant 0.000000e+00 : f32
    %13 = vector.broadcast %cst_11 : f32 to vector<4x32xf32>
    %14 = vector.extract_strided_slice %5 {offsets = [0, 0], sizes = [4, 96], strides = [1, 1]} : vector<32x96xf32> to vector<4x96xf32>
    %cst_12 = arith.constant dense<0.000000e+00> : vector<4x96xf32>
    %15 = tpu.matmul %13, %6, %cst_12 {dimension_numbers = #tpu.dot_dimension_numbers<[1], [0], [0], [1], [0, 0, 1, 1], [], []>} : vector<4x32xf32>, vector<32x96xf32>, vector<4x96xf32> -> vector<4x96xf32>
    %16 = vector.extract_strided_slice %14 {offsets = [0, 0], sizes = [4, 64], strides = [1, 1]} : vector<4x96xf32> to vector<4x64xf32>
    %17 = vector.extract_strided_slice %15 {offsets = [0, 0], sizes = [4, 64], strides = [1, 1]} : vector<4x96xf32> to vector<4x64xf32>
    %18 = arith.addf %16, %17 : vector<4x64xf32>
    %19 = arith.negf %18 : vector<4x64xf32>
    %20 = math.exp %19 : vector<4x64xf32>
    %cst_13 = arith.constant 1.000000e+00 : f32
    %21 = vector.broadcast %cst_13 : f32 to vector<4x64xf32>
    %22 = arith.addf %21, %20 : vector<4x64xf32>
    %23 = arith.divf %21, %22 : vector<4x64xf32>
    %24 = vector.extract_strided_slice %23 {offsets = [0, 0], sizes = [4, 32], strides = [1, 1]} : vector<4x64xf32> to vector<4x32xf32>
    %25 = vector.extract_strided_slice %23 {offsets = [0, 32], sizes = [4, 32], strides = [1, 1]} : vector<4x64xf32> to vector<4x32xf32>
    %26 = vector.extract_strided_slice %14 {offsets = [0, 64], sizes = [4, 32], strides = [1, 1]} : vector<4x96xf32> to vector<4x32xf32>
    %27 = vector.extract_strided_slice %15 {offsets = [0, 64], sizes = [4, 32], strides = [1, 1]} : vector<4x96xf32> to vector<4x32xf32>
    %28 = arith.addf %27, %9 : vector<4x32xf32>
    %29 = arith.mulf %24, %28 : vector<4x32xf32>
    %30 = arith.addf %26, %29 : vector<4x32xf32>
    %31 = math.tanh %30 : vector<4x32xf32>
    %cst_14 = arith.constant 1.000000e+00 : f32
    %32 = vector.broadcast %cst_14 : f32 to vector<4x32xf32>
    %33 = arith.subf %32, %25 : vector<4x32xf32>
    %34 = arith.mulf %33, %31 : vector<4x32xf32>
    %35 = arith.mulf %25, %13 : vector<4x32xf32>
    %36 = arith.addf %34, %35 : vector<4x32xf32>
    %c0_15 = arith.constant 0 : index
    %c0_16 = arith.constant 0 : index
    %37 = vector.load %arg6[%c0_15, %c0_16] : memref<256x1xf32, #tpu.memory_space<vmem>>, vector<32x1xf32>
    %cst_17 = arith.constant dense<0.000000e+00> : vector<4x1xf32>
    %38 = tpu.matmul %36, %37, %cst_17 {dimension_numbers = #tpu.dot_dimension_numbers<[1], [0], [0], [1], [0, 0, 1, 1], [], []>} : vector<4x32xf32>, vector<32x1xf32>, vector<4x1xf32> -> vector<4x1xf32>
    %39 = arith.addf %12, %38 : vector<4x1xf32>
    %40 = vector.extract_strided_slice %5 {offsets = [4, 0], sizes = [4, 96], strides = [1, 1]} : vector<32x96xf32> to vector<4x96xf32>
    %cst_18 = arith.constant dense<0.000000e+00> : vector<4x96xf32>
    %41 = tpu.matmul %36, %6, %cst_18 {dimension_numbers = #tpu.dot_dimension_numbers<[1], [0], [0], [1], [0, 0, 1, 1], [], []>} : vector<4x32xf32>, vector<32x96xf32>, vector<4x96xf32> -> vector<4x96xf32>
    %42 = vector.extract_strided_slice %40 {offsets = [0, 0], sizes = [4, 64], strides = [1, 1]} : vector<4x96xf32> to vector<4x64xf32>
    %43 = vector.extract_strided_slice %41 {offsets = [0, 0], sizes = [4, 64], strides = [1, 1]} : vector<4x96xf32> to vector<4x64xf32>
    %44 = arith.addf %42, %43 : vector<4x64xf32>
    %45 = arith.negf %44 : vector<4x64xf32>
    %46 = math.exp %45 : vector<4x64xf32>
    %cst_19 = arith.constant 1.000000e+00 : f32
    %47 = vector.broadcast %cst_19 : f32 to vector<4x64xf32>
    %48 = arith.addf %47, %46 : vector<4x64xf32>
    %49 = arith.divf %47, %48 : vector<4x64xf32>
    %50 = vector.extract_strided_slice %49 {offsets = [0, 0], sizes = [4, 32], strides = [1, 1]} : vector<4x64xf32> to vector<4x32xf32>
    %51 = vector.extract_strided_slice %49 {offsets = [0, 32], sizes = [4, 32], strides = [1, 1]} : vector<4x64xf32> to vector<4x32xf32>
    %52 = vector.extract_strided_slice %40 {offsets = [0, 64], sizes = [4, 32], strides = [1, 1]} : vector<4x96xf32> to vector<4x32xf32>
    %53 = vector.extract_strided_slice %41 {offsets = [0, 64], sizes = [4, 32], strides = [1, 1]} : vector<4x96xf32> to vector<4x32xf32>
    %54 = arith.addf %53, %9 : vector<4x32xf32>
    %55 = arith.mulf %50, %54 : vector<4x32xf32>
    %56 = arith.addf %52, %55 : vector<4x32xf32>
    %57 = math.tanh %56 : vector<4x32xf32>
    %cst_20 = arith.constant 1.000000e+00 : f32
    %58 = vector.broadcast %cst_20 : f32 to vector<4x32xf32>
    %59 = arith.subf %58, %51 : vector<4x32xf32>
    %60 = arith.mulf %59, %57 : vector<4x32xf32>
    %61 = arith.mulf %51, %36 : vector<4x32xf32>
    %62 = arith.addf %60, %61 : vector<4x32xf32>
    %c32 = arith.constant 32 : index
    %c0_21 = arith.constant 0 : index
    %63 = vector.load %arg6[%c32, %c0_21] : memref<256x1xf32, #tpu.memory_space<vmem>>, vector<32x1xf32>
    %cst_22 = arith.constant dense<0.000000e+00> : vector<4x1xf32>
    %64 = tpu.matmul %62, %63, %cst_22 {dimension_numbers = #tpu.dot_dimension_numbers<[1], [0], [0], [1], [0, 0, 1, 1], [], []>} : vector<4x32xf32>, vector<32x1xf32>, vector<4x1xf32> -> vector<4x1xf32>
    %65 = arith.addf %39, %64 : vector<4x1xf32>
    %66 = vector.extract_strided_slice %5 {offsets = [8, 0], sizes = [4, 96], strides = [1, 1]} : vector<32x96xf32> to vector<4x96xf32>
    %cst_23 = arith.constant dense<0.000000e+00> : vector<4x96xf32>
    %67 = tpu.matmul %62, %6, %cst_23 {dimension_numbers = #tpu.dot_dimension_numbers<[1], [0], [0], [1], [0, 0, 1, 1], [], []>} : vector<4x32xf32>, vector<32x96xf32>, vector<4x96xf32> -> vector<4x96xf32>
    %68 = vector.extract_strided_slice %66 {offsets = [0, 0], sizes = [4, 64], strides = [1, 1]} : vector<4x96xf32> to vector<4x64xf32>
    %69 = vector.extract_strided_slice %67 {offsets = [0, 0], sizes = [4, 64], strides = [1, 1]} : vector<4x96xf32> to vector<4x64xf32>
    %70 = arith.addf %68, %69 : vector<4x64xf32>
    %71 = arith.negf %70 : vector<4x64xf32>
    %72 = math.exp %71 : vector<4x64xf32>
    %cst_24 = arith.constant 1.000000e+00 : f32
    %73 = vector.broadcast %cst_24 : f32 to vector<4x64xf32>
    %74 = arith.addf %73, %72 : vector<4x64xf32>
    %75 = arith.divf %73, %74 : vector<4x64xf32>
    %76 = vector.extract_strided_slice %75 {offsets = [0, 0], sizes = [4, 32], strides = [1, 1]} : vector<4x64xf32> to vector<4x32xf32>
    %77 = vector.extract_strided_slice %75 {offsets = [0, 32], sizes = [4, 32], strides = [1, 1]} : vector<4x64xf32> to vector<4x32xf32>
    %78 = vector.extract_strided_slice %66 {offsets = [0, 64], sizes = [4, 32], strides = [1, 1]} : vector<4x96xf32> to vector<4x32xf32>
    %79 = vector.extract_strided_slice %67 {offsets = [0, 64], sizes = [4, 32], strides = [1, 1]} : vector<4x96xf32> to vector<4x32xf32>
    %80 = arith.addf %79, %9 : vector<4x32xf32>
    %81 = arith.mulf %76, %80 : vector<4x32xf32>
    %82 = arith.addf %78, %81 : vector<4x32xf32>
    %83 = math.tanh %82 : vector<4x32xf32>
    %cst_25 = arith.constant 1.000000e+00 : f32
    %84 = vector.broadcast %cst_25 : f32 to vector<4x32xf32>
    %85 = arith.subf %84, %77 : vector<4x32xf32>
    %86 = arith.mulf %85, %83 : vector<4x32xf32>
    %87 = arith.mulf %77, %62 : vector<4x32xf32>
    %88 = arith.addf %86, %87 : vector<4x32xf32>
    %c64 = arith.constant 64 : index
    %c0_26 = arith.constant 0 : index
    %89 = vector.load %arg6[%c64, %c0_26] : memref<256x1xf32, #tpu.memory_space<vmem>>, vector<32x1xf32>
    %cst_27 = arith.constant dense<0.000000e+00> : vector<4x1xf32>
    %90 = tpu.matmul %88, %89, %cst_27 {dimension_numbers = #tpu.dot_dimension_numbers<[1], [0], [0], [1], [0, 0, 1, 1], [], []>} : vector<4x32xf32>, vector<32x1xf32>, vector<4x1xf32> -> vector<4x1xf32>
    %91 = arith.addf %65, %90 : vector<4x1xf32>
    %92 = vector.extract_strided_slice %5 {offsets = [12, 0], sizes = [4, 96], strides = [1, 1]} : vector<32x96xf32> to vector<4x96xf32>
    %cst_28 = arith.constant dense<0.000000e+00> : vector<4x96xf32>
    %93 = tpu.matmul %88, %6, %cst_28 {dimension_numbers = #tpu.dot_dimension_numbers<[1], [0], [0], [1], [0, 0, 1, 1], [], []>} : vector<4x32xf32>, vector<32x96xf32>, vector<4x96xf32> -> vector<4x96xf32>
    %94 = vector.extract_strided_slice %92 {offsets = [0, 0], sizes = [4, 64], strides = [1, 1]} : vector<4x96xf32> to vector<4x64xf32>
    %95 = vector.extract_strided_slice %93 {offsets = [0, 0], sizes = [4, 64], strides = [1, 1]} : vector<4x96xf32> to vector<4x64xf32>
    %96 = arith.addf %94, %95 : vector<4x64xf32>
    %97 = arith.negf %96 : vector<4x64xf32>
    %98 = math.exp %97 : vector<4x64xf32>
    %cst_29 = arith.constant 1.000000e+00 : f32
    %99 = vector.broadcast %cst_29 : f32 to vector<4x64xf32>
    %100 = arith.addf %99, %98 : vector<4x64xf32>
    %101 = arith.divf %99, %100 : vector<4x64xf32>
    %102 = vector.extract_strided_slice %101 {offsets = [0, 0], sizes = [4, 32], strides = [1, 1]} : vector<4x64xf32> to vector<4x32xf32>
    %103 = vector.extract_strided_slice %101 {offsets = [0, 32], sizes = [4, 32], strides = [1, 1]} : vector<4x64xf32> to vector<4x32xf32>
    %104 = vector.extract_strided_slice %92 {offsets = [0, 64], sizes = [4, 32], strides = [1, 1]} : vector<4x96xf32> to vector<4x32xf32>
    %105 = vector.extract_strided_slice %93 {offsets = [0, 64], sizes = [4, 32], strides = [1, 1]} : vector<4x96xf32> to vector<4x32xf32>
    %106 = arith.addf %105, %9 : vector<4x32xf32>
    %107 = arith.mulf %102, %106 : vector<4x32xf32>
    %108 = arith.addf %104, %107 : vector<4x32xf32>
    %109 = math.tanh %108 : vector<4x32xf32>
    %cst_30 = arith.constant 1.000000e+00 : f32
    %110 = vector.broadcast %cst_30 : f32 to vector<4x32xf32>
    %111 = arith.subf %110, %103 : vector<4x32xf32>
    %112 = arith.mulf %111, %109 : vector<4x32xf32>
    %113 = arith.mulf %103, %88 : vector<4x32xf32>
    %114 = arith.addf %112, %113 : vector<4x32xf32>
    %c96 = arith.constant 96 : index
    %c0_31 = arith.constant 0 : index
    %115 = vector.load %arg6[%c96, %c0_31] : memref<256x1xf32, #tpu.memory_space<vmem>>, vector<32x1xf32>
    %cst_32 = arith.constant dense<0.000000e+00> : vector<4x1xf32>
    %116 = tpu.matmul %114, %115, %cst_32 {dimension_numbers = #tpu.dot_dimension_numbers<[1], [0], [0], [1], [0, 0, 1, 1], [], []>} : vector<4x32xf32>, vector<32x1xf32>, vector<4x1xf32> -> vector<4x1xf32>
    %117 = arith.addf %91, %116 : vector<4x1xf32>
    %118 = vector.extract_strided_slice %5 {offsets = [16, 0], sizes = [4, 96], strides = [1, 1]} : vector<32x96xf32> to vector<4x96xf32>
    %cst_33 = arith.constant dense<0.000000e+00> : vector<4x96xf32>
    %119 = tpu.matmul %114, %6, %cst_33 {dimension_numbers = #tpu.dot_dimension_numbers<[1], [0], [0], [1], [0, 0, 1, 1], [], []>} : vector<4x32xf32>, vector<32x96xf32>, vector<4x96xf32> -> vector<4x96xf32>
    %120 = vector.extract_strided_slice %118 {offsets = [0, 0], sizes = [4, 64], strides = [1, 1]} : vector<4x96xf32> to vector<4x64xf32>
    %121 = vector.extract_strided_slice %119 {offsets = [0, 0], sizes = [4, 64], strides = [1, 1]} : vector<4x96xf32> to vector<4x64xf32>
    %122 = arith.addf %120, %121 : vector<4x64xf32>
    %123 = arith.negf %122 : vector<4x64xf32>
    %124 = math.exp %123 : vector<4x64xf32>
    %cst_34 = arith.constant 1.000000e+00 : f32
    %125 = vector.broadcast %cst_34 : f32 to vector<4x64xf32>
    %126 = arith.addf %125, %124 : vector<4x64xf32>
    %127 = arith.divf %125, %126 : vector<4x64xf32>
    %128 = vector.extract_strided_slice %127 {offsets = [0, 0], sizes = [4, 32], strides = [1, 1]} : vector<4x64xf32> to vector<4x32xf32>
    %129 = vector.extract_strided_slice %127 {offsets = [0, 32], sizes = [4, 32], strides = [1, 1]} : vector<4x64xf32> to vector<4x32xf32>
    %130 = vector.extract_strided_slice %118 {offsets = [0, 64], sizes = [4, 32], strides = [1, 1]} : vector<4x96xf32> to vector<4x32xf32>
    %131 = vector.extract_strided_slice %119 {offsets = [0, 64], sizes = [4, 32], strides = [1, 1]} : vector<4x96xf32> to vector<4x32xf32>
    %132 = arith.addf %131, %9 : vector<4x32xf32>
    %133 = arith.mulf %128, %132 : vector<4x32xf32>
    %134 = arith.addf %130, %133 : vector<4x32xf32>
    %135 = math.tanh %134 : vector<4x32xf32>
    %cst_35 = arith.constant 1.000000e+00 : f32
    %136 = vector.broadcast %cst_35 : f32 to vector<4x32xf32>
    %137 = arith.subf %136, %129 : vector<4x32xf32>
    %138 = arith.mulf %137, %135 : vector<4x32xf32>
    %139 = arith.mulf %129, %114 : vector<4x32xf32>
    %140 = arith.addf %138, %139 : vector<4x32xf32>
    %c128 = arith.constant 128 : index
    %c0_36 = arith.constant 0 : index
    %141 = vector.load %arg6[%c128, %c0_36] : memref<256x1xf32, #tpu.memory_space<vmem>>, vector<32x1xf32>
    %cst_37 = arith.constant dense<0.000000e+00> : vector<4x1xf32>
    %142 = tpu.matmul %140, %141, %cst_37 {dimension_numbers = #tpu.dot_dimension_numbers<[1], [0], [0], [1], [0, 0, 1, 1], [], []>} : vector<4x32xf32>, vector<32x1xf32>, vector<4x1xf32> -> vector<4x1xf32>
    %143 = arith.addf %117, %142 : vector<4x1xf32>
    %144 = vector.extract_strided_slice %5 {offsets = [20, 0], sizes = [4, 96], strides = [1, 1]} : vector<32x96xf32> to vector<4x96xf32>
    %cst_38 = arith.constant dense<0.000000e+00> : vector<4x96xf32>
    %145 = tpu.matmul %140, %6, %cst_38 {dimension_numbers = #tpu.dot_dimension_numbers<[1], [0], [0], [1], [0, 0, 1, 1], [], []>} : vector<4x32xf32>, vector<32x96xf32>, vector<4x96xf32> -> vector<4x96xf32>
    %146 = vector.extract_strided_slice %144 {offsets = [0, 0], sizes = [4, 64], strides = [1, 1]} : vector<4x96xf32> to vector<4x64xf32>
    %147 = vector.extract_strided_slice %145 {offsets = [0, 0], sizes = [4, 64], strides = [1, 1]} : vector<4x96xf32> to vector<4x64xf32>
    %148 = arith.addf %146, %147 : vector<4x64xf32>
    %149 = arith.negf %148 : vector<4x64xf32>
    %150 = math.exp %149 : vector<4x64xf32>
    %cst_39 = arith.constant 1.000000e+00 : f32
    %151 = vector.broadcast %cst_39 : f32 to vector<4x64xf32>
    %152 = arith.addf %151, %150 : vector<4x64xf32>
    %153 = arith.divf %151, %152 : vector<4x64xf32>
    %154 = vector.extract_strided_slice %153 {offsets = [0, 0], sizes = [4, 32], strides = [1, 1]} : vector<4x64xf32> to vector<4x32xf32>
    %155 = vector.extract_strided_slice %153 {offsets = [0, 32], sizes = [4, 32], strides = [1, 1]} : vector<4x64xf32> to vector<4x32xf32>
    %156 = vector.extract_strided_slice %144 {offsets = [0, 64], sizes = [4, 32], strides = [1, 1]} : vector<4x96xf32> to vector<4x32xf32>
    %157 = vector.extract_strided_slice %145 {offsets = [0, 64], sizes = [4, 32], strides = [1, 1]} : vector<4x96xf32> to vector<4x32xf32>
    %158 = arith.addf %157, %9 : vector<4x32xf32>
    %159 = arith.mulf %154, %158 : vector<4x32xf32>
    %160 = arith.addf %156, %159 : vector<4x32xf32>
    %161 = math.tanh %160 : vector<4x32xf32>
    %cst_40 = arith.constant 1.000000e+00 : f32
    %162 = vector.broadcast %cst_40 : f32 to vector<4x32xf32>
    %163 = arith.subf %162, %155 : vector<4x32xf32>
    %164 = arith.mulf %163, %161 : vector<4x32xf32>
    %165 = arith.mulf %155, %140 : vector<4x32xf32>
    %166 = arith.addf %164, %165 : vector<4x32xf32>
    %c160 = arith.constant 160 : index
    %c0_41 = arith.constant 0 : index
    %167 = vector.load %arg6[%c160, %c0_41] : memref<256x1xf32, #tpu.memory_space<vmem>>, vector<32x1xf32>
    %cst_42 = arith.constant dense<0.000000e+00> : vector<4x1xf32>
    %168 = tpu.matmul %166, %167, %cst_42 {dimension_numbers = #tpu.dot_dimension_numbers<[1], [0], [0], [1], [0, 0, 1, 1], [], []>} : vector<4x32xf32>, vector<32x1xf32>, vector<4x1xf32> -> vector<4x1xf32>
    %169 = arith.addf %143, %168 : vector<4x1xf32>
    %170 = vector.extract_strided_slice %5 {offsets = [24, 0], sizes = [4, 96], strides = [1, 1]} : vector<32x96xf32> to vector<4x96xf32>
    %cst_43 = arith.constant dense<0.000000e+00> : vector<4x96xf32>
    %171 = tpu.matmul %166, %6, %cst_43 {dimension_numbers = #tpu.dot_dimension_numbers<[1], [0], [0], [1], [0, 0, 1, 1], [], []>} : vector<4x32xf32>, vector<32x96xf32>, vector<4x96xf32> -> vector<4x96xf32>
    %172 = vector.extract_strided_slice %170 {offsets = [0, 0], sizes = [4, 64], strides = [1, 1]} : vector<4x96xf32> to vector<4x64xf32>
    %173 = vector.extract_strided_slice %171 {offsets = [0, 0], sizes = [4, 64], strides = [1, 1]} : vector<4x96xf32> to vector<4x64xf32>
    %174 = arith.addf %172, %173 : vector<4x64xf32>
    %175 = arith.negf %174 : vector<4x64xf32>
    %176 = math.exp %175 : vector<4x64xf32>
    %cst_44 = arith.constant 1.000000e+00 : f32
    %177 = vector.broadcast %cst_44 : f32 to vector<4x64xf32>
    %178 = arith.addf %177, %176 : vector<4x64xf32>
    %179 = arith.divf %177, %178 : vector<4x64xf32>
    %180 = vector.extract_strided_slice %179 {offsets = [0, 0], sizes = [4, 32], strides = [1, 1]} : vector<4x64xf32> to vector<4x32xf32>
    %181 = vector.extract_strided_slice %179 {offsets = [0, 32], sizes = [4, 32], strides = [1, 1]} : vector<4x64xf32> to vector<4x32xf32>
    %182 = vector.extract_strided_slice %170 {offsets = [0, 64], sizes = [4, 32], strides = [1, 1]} : vector<4x96xf32> to vector<4x32xf32>
    %183 = vector.extract_strided_slice %171 {offsets = [0, 64], sizes = [4, 32], strides = [1, 1]} : vector<4x96xf32> to vector<4x32xf32>
    %184 = arith.addf %183, %9 : vector<4x32xf32>
    %185 = arith.mulf %180, %184 : vector<4x32xf32>
    %186 = arith.addf %182, %185 : vector<4x32xf32>
    %187 = math.tanh %186 : vector<4x32xf32>
    %cst_45 = arith.constant 1.000000e+00 : f32
    %188 = vector.broadcast %cst_45 : f32 to vector<4x32xf32>
    %189 = arith.subf %188, %181 : vector<4x32xf32>
    %190 = arith.mulf %189, %187 : vector<4x32xf32>
    %191 = arith.mulf %181, %166 : vector<4x32xf32>
    %192 = arith.addf %190, %191 : vector<4x32xf32>
    %c192 = arith.constant 192 : index
    %c0_46 = arith.constant 0 : index
    %193 = vector.load %arg6[%c192, %c0_46] : memref<256x1xf32, #tpu.memory_space<vmem>>, vector<32x1xf32>
    %cst_47 = arith.constant dense<0.000000e+00> : vector<4x1xf32>
    %194 = tpu.matmul %192, %193, %cst_47 {dimension_numbers = #tpu.dot_dimension_numbers<[1], [0], [0], [1], [0, 0, 1, 1], [], []>} : vector<4x32xf32>, vector<32x1xf32>, vector<4x1xf32> -> vector<4x1xf32>
    %195 = arith.addf %169, %194 : vector<4x1xf32>
    %196 = vector.extract_strided_slice %5 {offsets = [28, 0], sizes = [4, 96], strides = [1, 1]} : vector<32x96xf32> to vector<4x96xf32>
    %cst_48 = arith.constant dense<0.000000e+00> : vector<4x96xf32>
    %197 = tpu.matmul %192, %6, %cst_48 {dimension_numbers = #tpu.dot_dimension_numbers<[1], [0], [0], [1], [0, 0, 1, 1], [], []>} : vector<4x32xf32>, vector<32x96xf32>, vector<4x96xf32> -> vector<4x96xf32>
    %198 = vector.extract_strided_slice %196 {offsets = [0, 0], sizes = [4, 64], strides = [1, 1]} : vector<4x96xf32> to vector<4x64xf32>
    %199 = vector.extract_strided_slice %197 {offsets = [0, 0], sizes = [4, 64], strides = [1, 1]} : vector<4x96xf32> to vector<4x64xf32>
    %200 = arith.addf %198, %199 : vector<4x64xf32>
    %201 = arith.negf %200 : vector<4x64xf32>
    %202 = math.exp %201 : vector<4x64xf32>
    %cst_49 = arith.constant 1.000000e+00 : f32
    %203 = vector.broadcast %cst_49 : f32 to vector<4x64xf32>
    %204 = arith.addf %203, %202 : vector<4x64xf32>
    %205 = arith.divf %203, %204 : vector<4x64xf32>
    %206 = vector.extract_strided_slice %205 {offsets = [0, 0], sizes = [4, 32], strides = [1, 1]} : vector<4x64xf32> to vector<4x32xf32>
    %207 = vector.extract_strided_slice %205 {offsets = [0, 32], sizes = [4, 32], strides = [1, 1]} : vector<4x64xf32> to vector<4x32xf32>
    %208 = vector.extract_strided_slice %196 {offsets = [0, 64], sizes = [4, 32], strides = [1, 1]} : vector<4x96xf32> to vector<4x32xf32>
    %209 = vector.extract_strided_slice %197 {offsets = [0, 64], sizes = [4, 32], strides = [1, 1]} : vector<4x96xf32> to vector<4x32xf32>
    %210 = arith.addf %209, %9 : vector<4x32xf32>
    %211 = arith.mulf %206, %210 : vector<4x32xf32>
    %212 = arith.addf %208, %211 : vector<4x32xf32>
    %213 = math.tanh %212 : vector<4x32xf32>
    %cst_50 = arith.constant 1.000000e+00 : f32
    %214 = vector.broadcast %cst_50 : f32 to vector<4x32xf32>
    %215 = arith.subf %214, %207 : vector<4x32xf32>
    %216 = arith.mulf %215, %213 : vector<4x32xf32>
    %217 = arith.mulf %207, %192 : vector<4x32xf32>
    %218 = arith.addf %216, %217 : vector<4x32xf32>
    %c224 = arith.constant 224 : index
    %c0_51 = arith.constant 0 : index
    %219 = vector.load %arg6[%c224, %c0_51] : memref<256x1xf32, #tpu.memory_space<vmem>>, vector<32x1xf32>
    %cst_52 = arith.constant dense<0.000000e+00> : vector<4x1xf32>
    %220 = tpu.matmul %218, %219, %cst_52 {dimension_numbers = #tpu.dot_dimension_numbers<[1], [0], [0], [1], [0, 0, 1, 1], [], []>} : vector<4x32xf32>, vector<32x1xf32>, vector<4x1xf32> -> vector<4x1xf32>
    %221 = arith.addf %195, %220 : vector<4x1xf32>
    %c0_53 = arith.constant 0 : index
    %c0_54 = arith.constant 0 : index
    %222 = vector.load %arg8[%c0_53, %c0_54] : memref<4x1xf32, #tpu.memory_space<vmem>>, vector<4x1xf32>
    tpu.vector_store %arg8[%c0_53, %c0_54], %221 {strides = array<i32>} : memref<4x1xf32, #tpu.memory_space<vmem>>, vector<4x1xf32>,
    %c0_55 = arith.constant 0 : index
    %c0_56 = arith.constant 0 : index
    %223 = vector.load %arg9[%c0_55, %c0_56] : memref<4x32xf32, #tpu.memory_space<vmem>>, vector<4x32xf32>
    tpu.vector_store %arg9[%c0_55, %c0_56], %218 {strides = array<i32>} : memref<4x32xf32, #tpu.memory_space<vmem>>, vector<4x32xf32>,
    return
  }
  func.func @transform_0(%arg0: i32) -> (i32, i32) {
    %c0_i32 = arith.constant 0 : i32
    %c0_i32_0 = arith.constant 0 : i32
    %c0_i32_1 = arith.constant 0 : i32
    return %c0_i32, %c0_i32_0 : i32, i32
  }
  func.func @transform_1(%arg0: i32) -> (i32, i32) {
    %c0_i32 = arith.constant 0 : i32
    %c0_i32_0 = arith.constant 0 : i32
    %c0_i32_1 = arith.constant 0 : i32
    return %c0_i32, %c0_i32_0 : i32, i32
  }
  func.func @transform_2(%arg0: i32) -> (i32, i32) {
    %c0_i32 = arith.constant 0 : i32
    %c0_i32_0 = arith.constant 0 : i32
    %c0_i32_1 = arith.constant 0 : i32
    return %c0_i32, %c0_i32_0 : i32, i32
  }
  func.func @transform_3(%arg0: i32) -> (i32, i32) {
    %c0_i32 = arith.constant 0 : i32
    %c0_i32_0 = arith.constant 0 : i32
    %c0_i32_1 = arith.constant 0 : i32
    return %c0_i32, %c0_i32_0 : i32, i32
  }
  func.func @transform_4(%arg0: i32) -> (i32, i32) {
    %c0_i32 = arith.constant 0 : i32
    %c0_i32_0 = arith.constant 0 : i32
    %c0_i32_1 = arith.constant 0 : i32
    return %c0_i32, %c0_i32_0 : i32, i32
  }
  func.func @transform_5(%arg0: i32) -> (i32, i32) {
    %c0_i32 = arith.constant 0 : i32
    %c0_i32_0 = arith.constant 0 : i32
    %c0_i32_1 = arith.constant 0 : i32
    return %c0_i32, %c0_i32_0 : i32, i32
  }
  func.func @transform_6(%arg0: i32) -> (i32, i32) {
    %c0_i32 = arith.constant 0 : i32
    %c0_i32_0 = arith.constant 0 : i32
    %c0_i32_1 = arith.constant 0 : i32
    return %c0_i32, %c0_i32_0 : i32, i32
  }
  func.func @transform_7(%arg0: i32) -> (i32, i32) {
    %c0_i32 = arith.constant 0 : i32
    %c0_i32_0 = arith.constant 0 : i32
    %c0_i32_1 = arith.constant 0 : i32
    return %c0_i32, %c0_i32_0 : i32, i32
  }
  func.func @transform_8(%arg0: i32) -> (i32, i32) {
    %c0_i32 = arith.constant 0 : i32
    %c0_i32_0 = arith.constant 0 : i32
    %c0_i32_1 = arith.constant 0 : i32
    return %c0_i32, %c0_i32_0 : i32, i32
  }
}

</mosaic_0001>

<llo_original>
// kernel: neural_network_forward.1
$region0: #{neural_network_forward.1}
  #allocation0 [shape = 'u32[]', space=smem, size = 0x4, offset = 0x4, fixed_abs, tag = 'smem constant byte address 0x4 - core index']
  #allocation1 [shape = 'u32[72,128]{1,0:T(1,128)}', space=vmem, size = 0x9000, scoped, tag = 'internal scratch']
  #allocation2 [shape = 'f32[1,1]{1,0:T(1,128)S(1)}', space=vmem, size = 0x200, scoped, tag = 'scoped memory for neural_network_forward.1']
  %s0 = inlined_call_operand.vmem [shape: f32[32,14], index: 0, kind: input, shape index: {}]
  %s1 = inlined_call_operand.vmem [shape: f32[14,96], index: 1, kind: input, shape index: {}]
  %s2 = inlined_call_operand.vmem [shape: f32[32,96], index: 2, kind: input, shape index: {}]
  %s3 = inlined_call_operand.vmem [shape: f32[1,96], index: 3, kind: input, shape index: {}]
  %s4 = inlined_call_operand.vmem [shape: f32[1,32], index: 4, kind: input, shape index: {}]
  %s5 = inlined_call_operand.vmem [shape: f32[256,1], index: 5, kind: input, shape index: {}]
  %s6 = inlined_call_operand.<no memory space> [shape: f32[1,1], index: 6, kind: input, shape index: {}]
  %s7 = inlined_call_operand.vmem [shape: f32[4,1], index: 7, kind: output, shape index: {0}]
  %s8 = inlined_call_operand.hbm [shape: f32[4,32], index: 8, kind: output, shape index: {1}]
  %9 = xla_tuple %s7, %s8
  %s10 = sld [smem:[#allocation0]]
  $region46: #{neural_network_forward.1} parent=0
    _
  %s12 = ssub.s32 1, %s10
  %s13 = scalar_select 0, %s12, %s10
  %v14 = vstv %s6
  %15 = vst [vmem:[#allocation2] sm:$0x1] %v14
  $region1: #{neural_network_forward.1} parent=0
    #allocation3 [shape = 'u8[2048]{0}', space=vmem, size = 0x800, scoped, tag = 'output window, operand 1, single buffered']
    #allocation4 [shape = 's32[1]{0}', space=sflag, size = 0x4, scoped, tag = 'scoped memory for neural_network_forward.1']
    %16 = vsyncpa [#allocation4], 0
    // Predicated region
    $region2: #{neural_network_forward.1} parent=1 // pred_check
      _
    $region3: #{neural_network_forward.1} parent=1 // pred_check_branch
      %18 = sbr.rel (0) target = $region5
    $region4: #{neural_network_forward.1} parent=1 // pred_region
      _
    $region5: #{neural_network_forward.1} parent=1 // pred_fallthru
      _
    // Predicated region
    $region6: #{neural_network_forward.1} parent=1 // pred_check
      _
    $region7: #{neural_network_forward.1} parent=1 // pred_check_branch
      %20 = sbr.rel (0) target = $region9
    $region8: #{neural_network_forward.1} parent=1 // pred_region
      _
    $region9: #{neural_network_forward.1} parent=1 // pred_fallthru
      _
    // Predicated region
    $region10: #{neural_network_forward.1} parent=1 // pred_check
      _
    $region11: #{neural_network_forward.1} parent=1 // pred_check_branch
      %22 = sbr.rel (0) target = $region13
    $region12: #{neural_network_forward.1} parent=1 // pred_region
      _
    $region13: #{neural_network_forward.1} parent=1 // pred_fallthru
      _
    // Predicated region
    $region14: #{neural_network_forward.1} parent=1 // pred_check
      _
    $region15: #{neural_network_forward.1} parent=1 // pred_check_branch
      %24 = sbr.rel (0) target = $region17
    $region16: #{neural_network_forward.1} parent=1 // pred_region
      _
    $region17: #{neural_network_forward.1} parent=1 // pred_fallthru
      _
    // Predicated region
    $region18: #{neural_network_forward.1} parent=1 // pred_check
      _
    $region19: #{neural_network_forward.1} parent=1 // pred_check_branch
      %26 = sbr.rel (0) target = $region21
    $region20: #{neural_network_forward.1} parent=1 // pred_region
      _
    $region21: #{neural_network_forward.1} parent=1 // pred_fallthru
      _
    // Predicated region
    $region22: #{neural_network_forward.1} parent=1 // pred_check
      _
    $region23: #{neural_network_forward.1} parent=1 // pred_check_branch
      %28 = sbr.rel (0) target = $region25
    $region24: #{neural_network_forward.1} parent=1 // pred_region
      _
    $region25: #{neural_network_forward.1} parent=1 // pred_fallthru
      _
    // Predicated region
    $region26: #{neural_network_forward.1} parent=1 // pred_check
      _
    $region27: #{neural_network_forward.1} parent=1 // pred_check_branch
      %30 = sbr.rel (0) target = $region29
    $region28: #{neural_network_forward.1} parent=1 // pred_region
      _
    $region29: #{neural_network_forward.1} parent=1 // pred_fallthru
      _
    %v31 = vld [vmem:[%s0] sm:$0xff]
    %v32 = vld [vmem:[%s0 + $0x8] sm:$0xff]
    %v33 = vld [vmem:[%s0 + $0x10] sm:$0xff]
    %v34 = vld [vmem:[%s0 + $0x18] sm:$0xff]
    %v35 = vld [vmem:[%s1] sm:$0xff]
    %v36 = vld [vmem:[%s1 + $0x8] sm:$0x3f]
    %v37 = vld [vmem:[%s3] sm:$0x1]
    %v39 = vperm.slane %v37, 0
    %vm41 = vcmask 113664
    %v43 = vsel %vm41, %v31, 0
    %v46 = vsel %vm41, %v32, 0
    %v49 = vsel %vm41, %v33, 0
    %v52 = vsel %vm41, %v34, 0
    %vm54 = vcmask 1045504
    %v56 = vsel %vm54, %v36, 0
    %58 = vmatpush.msra.mxu0 0.0
    %59 = vmatpush.msra.mxu0 0.0
    %60 = vmatpush.msra.mxu0 0.0
    %61 = vmatpush.msra.mxu0 0.0
    %62 = vmatpush.msra.mxu0 0.0
    %63 = vmatpush.msra.mxu0 0.0
    %64 = vmatpush.msra.mxu0 0.0
    %65 = vmatpush.msra.mxu0 0.0
    %66 = vmatpush.msra.mxu0 0.0
    %67 = vmatpush.msra.mxu0 0.0
    %68 = vmatpush.msra.mxu0 0.0
    %69 = vmatpush.msra.mxu0 0.0
    %70 = vmatpush.msra.mxu0 0.0
    %71 = vmatpush.msra.mxu0 0.0
    %72 = vmatpush.msra.mxu0 %v56
    %73 = vmatpush.msra.mxu0 %v35
    %74 = vmatmul.f32.gmra.mxu0 %v43
    %v75 = vpop.f32.mrf.mxu0
    %v76 = vadd.f32 %v39, %v75
    %77 = vmatmul.f32.gmra.mxu0 %v46
    %v78 = vpop.f32.mrf.mxu0
    %v79 = vadd.f32 %v39, %v78
    %80 = vmatmul.f32.gmra.mxu0 %v49
    %v81 = vpop.f32.mrf.mxu0
    %v82 = vadd.f32 %v39, %v81
    %83 = vmatmul.f32.gmra.mxu0 %v52
    %v84 = vpop.f32.mrf.mxu0
    %v85 = vadd.f32 %v39, %v84
    %86 = vdwg.mxu0
    %v87 = vld [vmem:[%s2] sm:$0xff]
    %v88 = vld [vmem:[%s2 + $0x8] sm:$0xff]
    %v89 = vld [vmem:[%s2 + $0x10] sm:$0xff]
    %v90 = vld [vmem:[%s2 + $0x18] sm:$0xff]
    %v91 = vld [vmem:[%s4] sm:$0x1]
    %v93 = vperm.slane %v91, 0
    %v94 = vld [vmem:[#allocation2] sm:$0x1]
    %v96 = vperm.slane %v94, 0
    %vm98 = vcmask 261120
    %v100 = vsel %vm98, 0.0, 0
    %102 = vmatpush.msra.mxu0 0.0
    %103 = vmatpush.msra.mxu0 0.0
    %104 = vmatpush.msra.mxu0 0.0
    %105 = vmatpush.msra.mxu0 0.0
    %106 = vmatpush.msra.mxu0 0.0
    %107 = vmatpush.msra.mxu0 0.0
    %108 = vmatpush.msra.mxu0 0.0
    %109 = vmatpush.msra.mxu0 0.0
    %110 = vmatpush.msra.mxu0 0.0
    %111 = vmatpush.msra.mxu0 0.0
    %112 = vmatpush.msra.mxu0 0.0
    %113 = vmatpush.msra.mxu0 0.0
    %114 = vmatpush.msra.mxu0 %v90
    %115 = vmatpush.msra.mxu0 %v89
    %116 = vmatpush.msra.mxu0 %v88
    %117 = vmatpush.msra.mxu0 %v87
    %118 = vmatmul.f32.gmra.mxu0 %v100
    %v119 = vpop.f32.mrf.mxu0
    %v120 = vadd.f32 0.0, %v119
    %121 = vdwg.mxu0
    %v122 = vadd.f32 %v76, %v120
    %v123 = vxor.u32 %v122, 2147483648
    %v124 = vmul.f32 %v123, 1.442695
    %v125 = vpow.pop %v124
    %v126 = vadd.f32 %v125, 1.0
    %v127 = vrcp.pop %v126
    %v128 = vmul.f32 %v126, %v127
    %v129 = vsub.f32 1.0, %v128
    %v130 = vmul.f32 %v127, %v129
    %v131 = vadd.f32 %v127, %v130
    %vm132 = vweird.f32 %v126
    %vm133 = vweird.f32 %v127
    %vm134 = vmor %vm132, %vm133
    %v135 = vsel %vm134, %v127, %v131
    %v136 = vand.u32 2147483647, %v126
    %vm137 = vcmp.eq.f32.partialorder %v136, 8.507059e+37
    %v138 = vand.u32 %v126, 2147483648
    %v139 = vor.u32 1.1754944e-38, %v138
    %v140 = vsel %vm137, %v139, %v135
    %v141 = vmul.f32 1.0, %v140
    %142 = vrot.lane.b32.xlu0 %v93, 64
    %v143 = vpop.permute.xlu0 %142
    %v145 = vadd.f32 %v120, %v143
    %147 = vrot.lane.b32.xlu0 %v145, 64
    %v148 = vpop.permute.xlu0 %147
    %v150 = vmul.f32 %v141, %v148
    %152 = vrot.lane.b32.xlu0 %v150, 64
    %v153 = vpop.permute.xlu0 %152
    %v155 = vadd.f32 %v76, %v153
    %v156 = vtanh.pop %v155
    %v157 = vsub.f32 1.0, %v141
    %159 = vrot.lane.b32.xlu0 %v156, 96
    %v160 = vpop.permute.xlu0 %159
    %v162 = vmul.f32 %v157, %v160
    %v163 = vmul.f32 %v141, 0.0
    %v164 = vadd.f32 %v162, %v163
    %v165 = vld [vmem:[%s5] sm:$0xff]
    %v166 = vld [vmem:[%s5 + $0x8] sm:$0xff]
    %v167 = vld [vmem:[%s5 + $0x10] sm:$0xff]
    %v168 = vld [vmem:[%s5 + $0x18] sm:$0xff]
    %170 = vrot.lane.b32.xlu0 %v164, 96
    %v171 = vpop.permute.xlu0 %170
    %v172 = vsel %vm98, %v171, 0
    %174 = vmatpush.msra.mxu0 0.0
    %175 = vmatpush.msra.mxu0 0.0
    %176 = vmatpush.msra.mxu0 0.0
    %177 = vmatpush.msra.mxu0 0.0
    %178 = vmatpush.msra.mxu0 0.0
    %179 = vmatpush.msra.mxu0 0.0
    %180 = vmatpush.msra.mxu0 0.0
    %181 = vmatpush.msra.mxu0 0.0
    %182 = vmatpush.msra.mxu0 0.0
    %183 = vmatpush.msra.mxu0 0.0
    %184 = vmatpush.msra.mxu0 0.0
    %185 = vmatpush.msra.mxu0 0.0
    %186 = vmatpush.msra.mxu0 %v168
    %187 = vmatpush.msra.mxu0 %v167
    %188 = vmatpush.msra.mxu0 %v166
    %189 = vmatpush.msra.mxu0 %v165
    %190 = vmatmul.f32.gmra.mxu0 %v172
    %v191 = vpop.f32.mrf.mxu0
    %v192 = vadd.f32 0.0, %v191
    %193 = vdwg.mxu0
    %v194 = vadd.f32 %v96, %v192
    %195 = vmatpush.msra.mxu0 0.0
    %196 = vmatpush.msra.mxu0 0.0
    %197 = vmatpush.msra.mxu0 0.0
    %198 = vmatpush.msra.mxu0 0.0
    %199 = vmatpush.msra.mxu0 0.0
    %200 = vmatpush.msra.mxu0 0.0
    %201 = vmatpush.msra.mxu0 0.0
    %202 = vmatpush.msra.mxu0 0.0
    %203 = vmatpush.msra.mxu0 0.0
    %204 = vmatpush.msra.mxu0 0.0
    %205 = vmatpush.msra.mxu0 0.0
    %206 = vmatpush.msra.mxu0 0.0
    %207 = vmatpush.msra.mxu0 %v90
    %208 = vmatpush.msra.mxu0 %v89
    %209 = vmatpush.msra.mxu0 %v88
    %210 = vmatpush.msra.mxu0 %v87
    %211 = vmatmul.f32.gmra.mxu0 %v172
    %v212 = vpop.f32.mrf.mxu0
    %v213 = vadd.f32 0.0, %v212
    %214 = vdwg.mxu0
    %v216 = vrot.slane %v213, 4
    %v218 = vadd.f32 %v76, %v216
    %v219 = vxor.u32 %v218, 2147483648
    %v220 = vmul.f32 %v219, 1.442695
    %v221 = vpow.pop %v220
    %v222 = vadd.f32 %v221, 1.0
    %v223 = vrcp.pop %v222
    %v224 = vmul.f32 %v222, %v223
    %v225 = vsub.f32 1.0, %v224
    %v226 = vmul.f32 %v223, %v225
    %v227 = vadd.f32 %v223, %v226
    %vm228 = vweird.f32 %v222
    %vm229 = vweird.f32 %v223
    %vm230 = vmor %vm228, %vm229
    %v231 = vsel %vm230, %v223, %v227
    %v232 = vand.u32 2147483647, %v222
    %vm233 = vcmp.eq.f32.partialorder %v232, 8.507059e+37
    %v234 = vand.u32 %v222, 2147483648
    %v235 = vor.u32 1.1754944e-38, %v234
    %v236 = vsel %vm233, %v235, %v231
    %v237 = vmul.f32 1.0, %v236
    %v238 = vadd.f32 %v213, %v143
    %v240 = vrot.slane %v238, 4
    %241 = vrot.lane.b32.xlu0 %v240, 64
    %v242 = vpop.permute.xlu0 %241
    %v244 = vmul.f32 %v237, %v242
    %246 = vrot.lane.b32.xlu0 %v244, 64
    %v247 = vpop.permute.xlu0 %246
    %v249 = vadd.f32 %v76, %v247
    %v250 = vtanh.pop %v249
    %v251 = vsub.f32 1.0, %v237
    %253 = vrot.lane.b32.xlu0 %v250, 96
    %v254 = vpop.permute.xlu0 %253
    %v256 = vmul.f32 %v251, %v254
    %v257 = vrot.slane %v164, 4
    %v259 = vmul.f32 %v237, %v257
    %v260 = vadd.f32 %v256, %v259
    %v261 = vld [vmem:[%s5 + $0x20] sm:$0xff]
    %v262 = vld [vmem:[%s5 + $0x28] sm:$0xff]
    %v263 = vld [vmem:[%s5 + $0x30] sm:$0xff]
    %v264 = vld [vmem:[%s5 + $0x38] sm:$0xff]
    %v266 = vrot.slane %v260, 4
    %267 = vrot.lane.b32.xlu0 %v266, 96
    %v268 = vpop.permute.xlu0 %267
    %v269 = vsel %vm98, %v268, 0
    %271 = vmatpush.msra.mxu0 0.0
    %272 = vmatpush.msra.mxu0 0.0
    %273 = vmatpush.msra.mxu0 0.0
    %274 = vmatpush.msra.mxu0 0.0
    %275 = vmatpush.msra.mxu0 0.0
    %276 = vmatpush.msra.mxu0 0.0
    %277 = vmatpush.msra.mxu0 0.0
    %278 = vmatpush.msra.mxu0 0.0
    %279 = vmatpush.msra.mxu0 0.0
    %280 = vmatpush.msra.mxu0 0.0
    %281 = vmatpush.msra.mxu0 0.0
    %282 = vmatpush.msra.mxu0 0.0
    %283 = vmatpush.msra.mxu0 %v264
    %284 = vmatpush.msra.mxu0 %v263
    %285 = vmatpush.msra.mxu0 %v262
    %286 = vmatpush.msra.mxu0 %v261
    %287 = vmatmul.f32.gmra.mxu0 %v269
    %v288 = vpop.f32.mrf.mxu0
    %v289 = vadd.f32 0.0, %v288
    %290 = vdwg.mxu0
    %v291 = vadd.f32 %v194, %v289
    %292 = vmatpush.msra.mxu0 0.0
    %293 = vmatpush.msra.mxu0 0.0
    %294 = vmatpush.msra.mxu0 0.0
    %295 = vmatpush.msra.mxu0 0.0
    %296 = vmatpush.msra.mxu0 0.0
    %297 = vmatpush.msra.mxu0 0.0
    %298 = vmatpush.msra.mxu0 0.0
    %299 = vmatpush.msra.mxu0 0.0
    %300 = vmatpush.msra.mxu0 0.0
    %301 = vmatpush.msra.mxu0 0.0
    %302 = vmatpush.msra.mxu0 0.0
    %303 = vmatpush.msra.mxu0 0.0
    %304 = vmatpush.msra.mxu0 %v90
    %305 = vmatpush.msra.mxu0 %v89
    %306 = vmatpush.msra.mxu0 %v88
    %307 = vmatpush.msra.mxu0 %v87
    %308 = vmatmul.f32.gmra.mxu0 %v269
    %v309 = vpop.f32.mrf.mxu0
    %v310 = vadd.f32 0.0, %v309
    %311 = vdwg.mxu0
    %v312 = vadd.f32 %v79, %v310
    %v313 = vxor.u32 %v312, 2147483648
    %v314 = vmul.f32 %v313, 1.442695
    %v315 = vpow.pop %v314
    %v316 = vadd.f32 %v315, 1.0
    %v317 = vrcp.pop %v316
    %v318 = vmul.f32 %v316, %v317
    %v319 = vsub.f32 1.0, %v318
    %v320 = vmul.f32 %v317, %v319
    %v321 = vadd.f32 %v317, %v320
    %vm322 = vweird.f32 %v316
    %vm323 = vweird.f32 %v317
    %vm324 = vmor %vm322, %vm323
    %v325 = vsel %vm324, %v317, %v321
    %v326 = vand.u32 2147483647, %v316
    %vm327 = vcmp.eq.f32.partialorder %v326, 8.507059e+37
    %v328 = vand.u32 %v316, 2147483648
    %v329 = vor.u32 1.1754944e-38, %v328
    %v330 = vsel %vm327, %v329, %v325
    %v331 = vmul.f32 1.0, %v330
    %v332 = vadd.f32 %v310, %v143
    %334 = vrot.lane.b32.xlu0 %v332, 64
    %v335 = vpop.permute.xlu0 %334
    %v337 = vmul.f32 %v331, %v335
    %339 = vrot.lane.b32.xlu0 %v337, 64
    %v340 = vpop.permute.xlu0 %339
    %v342 = vadd.f32 %v79, %v340
    %v343 = vtanh.pop %v342
    %v344 = vsub.f32 1.0, %v331
    %346 = vrot.lane.b32.xlu0 %v343, 96
    %v347 = vpop.permute.xlu0 %346
    %v349 = vmul.f32 %v344, %v347
    %v351 = vmul.f32 %v331, %v266
    %v352 = vadd.f32 %v349, %v351
    %v353 = vld [vmem:[%s5 + $0x40] sm:$0xff]
    %v354 = vld [vmem:[%s5 + $0x48] sm:$0xff]
    %v355 = vld [vmem:[%s5 + $0x50] sm:$0xff]
    %v356 = vld [vmem:[%s5 + $0x58] sm:$0xff]
    %358 = vrot.lane.b32.xlu0 %v352, 96
    %v359 = vpop.permute.xlu0 %358
    %v360 = vsel %vm98, %v359, 0
    %362 = vmatpush.msra.mxu0 0.0
    %363 = vmatpush.msra.mxu0 0.0
    %364 = vmatpush.msra.mxu0 0.0
    %365 = vmatpush.msra.mxu0 0.0
    %366 = vmatpush.msra.mxu0 0.0
    %367 = vmatpush.msra.mxu0 0.0
    %368 = vmatpush.msra.mxu0 0.0
    %369 = vmatpush.msra.mxu0 0.0
    %370 = vmatpush.msra.mxu0 0.0
    %371 = vmatpush.msra.mxu0 0.0
    %372 = vmatpush.msra.mxu0 0.0
    %373 = vmatpush.msra.mxu0 0.0
    %374 = vmatpush.msra.mxu0 %v356
    %375 = vmatpush.msra.mxu0 %v355
    %376 = vmatpush.msra.mxu0 %v354
    %377 = vmatpush.msra.mxu0 %v353
    %378 = vmatmul.f32.gmra.mxu0 %v360
    %v379 = vpop.f32.mrf.mxu0
    %v380 = vadd.f32 0.0, %v379
    %381 = vdwg.mxu0
    %v382 = vadd.f32 %v291, %v380
    %383 = vmatpush.msra.mxu0 0.0
    %384 = vmatpush.msra.mxu0 0.0
    %385 = vmatpush.msra.mxu0 0.0
    %386 = vmatpush.msra.mxu0 0.0
    %387 = vmatpush.msra.mxu0 0.0
    %388 = vmatpush.msra.mxu0 0.0
    %389 = vmatpush.msra.mxu0 0.0
    %390 = vmatpush.msra.mxu0 0.0
    %391 = vmatpush.msra.mxu0 0.0
    %392 = vmatpush.msra.mxu0 0.0
    %393 = vmatpush.msra.mxu0 0.0
    %394 = vmatpush.msra.mxu0 0.0
    %395 = vmatpush.msra.mxu0 %v90
    %396 = vmatpush.msra.mxu0 %v89
    %397 = vmatpush.msra.mxu0 %v88
    %398 = vmatpush.msra.mxu0 %v87
    %399 = vmatmul.f32.gmra.mxu0 %v360
    %v400 = vpop.f32.mrf.mxu0
    %v401 = vadd.f32 0.0, %v400
    %402 = vdwg.mxu0
    %v404 = vrot.slane %v401, 4
    %v406 = vadd.f32 %v79, %v404
    %v407 = vxor.u32 %v406, 2147483648
    %v408 = vmul.f32 %v407, 1.442695
    %v409 = vpow.pop %v408
    %v410 = vadd.f32 %v409, 1.0
    %v411 = vrcp.pop %v410
    %v412 = vmul.f32 %v410, %v411
    %v413 = vsub.f32 1.0, %v412
    %v414 = vmul.f32 %v411, %v413
    %v415 = vadd.f32 %v411, %v414
    %vm416 = vweird.f32 %v410
    %vm417 = vweird.f32 %v411
    %vm418 = vmor %vm416, %vm417
    %v419 = vsel %vm418, %v411, %v415
    %v420 = vand.u32 2147483647, %v410
    %vm421 = vcmp.eq.f32.partialorder %v420, 8.507059e+37
    %v422 = vand.u32 %v410, 2147483648
    %v423 = vor.u32 1.1754944e-38, %v422
    %v424 = vsel %vm421, %v423, %v419
    %v425 = vmul.f32 1.0, %v424
    %v426 = vadd.f32 %v401, %v143
    %v428 = vrot.slane %v426, 4
    %429 = vrot.lane.b32.xlu0 %v428, 64
    %v430 = vpop.permute.xlu0 %429
    %v432 = vmul.f32 %v425, %v430
    %434 = vrot.lane.b32.xlu0 %v432, 64
    %v435 = vpop.permute.xlu0 %434
    %v437 = vadd.f32 %v79, %v435
    %v438 = vtanh.pop %v437
    %v439 = vsub.f32 1.0, %v425
    %441 = vrot.lane.b32.xlu0 %v438, 96
    %v442 = vpop.permute.xlu0 %441
    %v444 = vmul.f32 %v439, %v442
    %v445 = vrot.slane %v352, 4
    %v447 = vmul.f32 %v425, %v445
    %v448 = vadd.f32 %v444, %v447
    %v449 = vld [vmem:[%s5 + $0x60] sm:$0xff]
    %v450 = vld [vmem:[%s5 + $0x68] sm:$0xff]
    %v451 = vld [vmem:[%s5 + $0x70] sm:$0xff]
    %v452 = vld [vmem:[%s5 + $0x78] sm:$0xff]
    %v454 = vrot.slane %v448, 4
    %455 = vrot.lane.b32.xlu0 %v454, 96
    %v456 = vpop.permute.xlu0 %455
    %v457 = vsel %vm98, %v456, 0
    %459 = vmatpush.msra.mxu0 0.0
    %460 = vmatpush.msra.mxu0 0.0
    %461 = vmatpush.msra.mxu0 0.0
    %462 = vmatpush.msra.mxu0 0.0
    %463 = vmatpush.msra.mxu0 0.0
    %464 = vmatpush.msra.mxu0 0.0
    %465 = vmatpush.msra.mxu0 0.0
    %466 = vmatpush.msra.mxu0 0.0
    %467 = vmatpush.msra.mxu0 0.0
    %468 = vmatpush.msra.mxu0 0.0
    %469 = vmatpush.msra.mxu0 0.0
    %470 = vmatpush.msra.mxu0 0.0
    %471 = vmatpush.msra.mxu0 %v452
    %472 = vmatpush.msra.mxu0 %v451
    %473 = vmatpush.msra.mxu0 %v450
    %474 = vmatpush.msra.mxu0 %v449
    %475 = vmatmul.f32.gmra.mxu0 %v457
    %v476 = vpop.f32.mrf.mxu0
    %v477 = vadd.f32 0.0, %v476
    %478 = vdwg.mxu0
    %v479 = vadd.f32 %v382, %v477
    %480 = vmatpush.msra.mxu0 0.0
    %481 = vmatpush.msra.mxu0 0.0
    %482 = vmatpush.msra.mxu0 0.0
    %483 = vmatpush.msra.mxu0 0.0
    %484 = vmatpush.msra.mxu0 0.0
    %485 = vmatpush.msra.mxu0 0.0
    %486 = vmatpush.msra.mxu0 0.0
    %487 = vmatpush.msra.mxu0 0.0
    %488 = vmatpush.msra.mxu0 0.0
    %489 = vmatpush.msra.mxu0 0.0
    %490 = vmatpush.msra.mxu0 0.0
    %491 = vmatpush.msra.mxu0 0.0
    %492 = vmatpush.msra.mxu0 %v90
    %493 = vmatpush.msra.mxu0 %v89
    %494 = vmatpush.msra.mxu0 %v88
    %495 = vmatpush.msra.mxu0 %v87
    %496 = vmatmul.f32.gmra.mxu0 %v457
    %v497 = vpop.f32.mrf.mxu0
    %v498 = vadd.f32 0.0, %v497
    %499 = vdwg.mxu0
    %v500 = vadd.f32 %v82, %v498
    %v501 = vxor.u32 %v500, 2147483648
    %v502 = vmul.f32 %v501, 1.442695
    %v503 = vpow.pop %v502
    %v504 = vadd.f32 %v503, 1.0
    %v505 = vrcp.pop %v504
    %v506 = vmul.f32 %v504, %v505
    %v507 = vsub.f32 1.0, %v506
    %v508 = vmul.f32 %v505, %v507
    %v509 = vadd.f32 %v505, %v508
    %vm510 = vweird.f32 %v504
    %vm511 = vweird.f32 %v505
    %vm512 = vmor %vm510, %vm511
    %v513 = vsel %vm512, %v505, %v509
    %v514 = vand.u32 2147483647, %v504
    %vm515 = vcmp.eq.f32.partialorder %v514, 8.507059e+37
    %v516 = vand.u32 %v504, 2147483648
    %v517 = vor.u32 1.1754944e-38, %v516
    %v518 = vsel %vm515, %v517, %v513
    %v519 = vmul.f32 1.0, %v518
    %v520 = vadd.f32 %v498, %v143
    %522 = vrot.lane.b32.xlu0 %v520, 64
    %v523 = vpop.permute.xlu0 %522
    %v525 = vmul.f32 %v519, %v523
    %527 = vrot.lane.b32.xlu0 %v525, 64
    %v528 = vpop.permute.xlu0 %527
    %v530 = vadd.f32 %v82, %v528
    %v531 = vtanh.pop %v530
    %v532 = vsub.f32 1.0, %v519
    %534 = vrot.lane.b32.xlu0 %v531, 96
    %v535 = vpop.permute.xlu0 %534
    %v537 = vmul.f32 %v532, %v535
    %v539 = vmul.f32 %v519, %v454
    %v540 = vadd.f32 %v537, %v539
    %v541 = vld [vmem:[%s5 + $0x80] sm:$0xff]
    %v542 = vld [vmem:[%s5 + $0x88] sm:$0xff]
    %v543 = vld [vmem:[%s5 + $0x90] sm:$0xff]
    %v544 = vld [vmem:[%s5 + $0x98] sm:$0xff]
    %546 = vrot.lane.b32.xlu0 %v540, 96
    %v547 = vpop.permute.xlu0 %546
    %v548 = vsel %vm98, %v547, 0
    %550 = vmatpush.msra.mxu0 0.0
    %551 = vmatpush.msra.mxu0 0.0
    %552 = vmatpush.msra.mxu0 0.0
    %553 = vmatpush.msra.mxu0 0.0
    %554 = vmatpush.msra.mxu0 0.0
    %555 = vmatpush.msra.mxu0 0.0
    %556 = vmatpush.msra.mxu0 0.0
    %557 = vmatpush.msra.mxu0 0.0
    %558 = vmatpush.msra.mxu0 0.0
    %559 = vmatpush.msra.mxu0 0.0
    %560 = vmatpush.msra.mxu0 0.0
    %561 = vmatpush.msra.mxu0 0.0
    %562 = vmatpush.msra.mxu0 %v544
    %563 = vmatpush.msra.mxu0 %v543
    %564 = vmatpush.msra.mxu0 %v542
    %565 = vmatpush.msra.mxu0 %v541
    %566 = vmatmul.f32.gmra.mxu0 %v548
    %v567 = vpop.f32.mrf.mxu0
    %v568 = vadd.f32 0.0, %v567
    %569 = vdwg.mxu0
    %v570 = vadd.f32 %v479, %v568
    %571 = vmatpush.msra.mxu0 0.0
    %572 = vmatpush.msra.mxu0 0.0
    %573 = vmatpush.msra.mxu0 0.0
    %574 = vmatpush.msra.mxu0 0.0
    %575 = vmatpush.msra.mxu0 0.0
    %576 = vmatpush.msra.mxu0 0.0
    %577 = vmatpush.msra.mxu0 0.0
    %578 = vmatpush.msra.mxu0 0.0
    %579 = vmatpush.msra.mxu0 0.0
    %580 = vmatpush.msra.mxu0 0.0
    %581 = vmatpush.msra.mxu0 0.0
    %582 = vmatpush.msra.mxu0 0.0
    %583 = vmatpush.msra.mxu0 %v90
    %584 = vmatpush.msra.mxu0 %v89
    %585 = vmatpush.msra.mxu0 %v88
    %586 = vmatpush.msra.mxu0 %v87
    %587 = vmatmul.f32.gmra.mxu0 %v548
    %v588 = vpop.f32.mrf.mxu0
    %v589 = vadd.f32 0.0, %v588
    %590 = vdwg.mxu0
    %v592 = vrot.slane %v589, 4
    %v594 = vadd.f32 %v82, %v592
    %v595 = vxor.u32 %v594, 2147483648
    %v596 = vmul.f32 %v595, 1.442695
    %v597 = vpow.pop %v596
    %v598 = vadd.f32 %v597, 1.0
    %v599 = vrcp.pop %v598
    %v600 = vmul.f32 %v598, %v599
    %v601 = vsub.f32 1.0, %v600
    %v602 = vmul.f32 %v599, %v601
    %v603 = vadd.f32 %v599, %v602
    %vm604 = vweird.f32 %v598
    %vm605 = vweird.f32 %v599
    %vm606 = vmor %vm604, %vm605
    %v607 = vsel %vm606, %v599, %v603
    %v608 = vand.u32 2147483647, %v598
    %vm609 = vcmp.eq.f32.partialorder %v608, 8.507059e+37
    %v610 = vand.u32 %v598, 2147483648
    %v611 = vor.u32 1.1754944e-38, %v610
    %v612 = vsel %vm609, %v611, %v607
    %v613 = vmul.f32 1.0, %v612
    %v614 = vadd.f32 %v589, %v143
    %v616 = vrot.slane %v614, 4
    %617 = vrot.lane.b32.xlu0 %v616, 64
    %v618 = vpop.permute.xlu0 %617
    %v620 = vmul.f32 %v613, %v618
    %622 = vrot.lane.b32.xlu0 %v620, 64
    %v623 = vpop.permute.xlu0 %622
    %v625 = vadd.f32 %v82, %v623
    %v626 = vtanh.pop %v625
    %v627 = vsub.f32 1.0, %v613
    %629 = vrot.lane.b32.xlu0 %v626, 96
    %v630 = vpop.permute.xlu0 %629
    %v632 = vmul.f32 %v627, %v630
    %v633 = vrot.slane %v540, 4
    %v635 = vmul.f32 %v613, %v633
    %v636 = vadd.f32 %v632, %v635
    %v637 = vld [vmem:[%s5 + $0xa0] sm:$0xff]
    %v638 = vld [vmem:[%s5 + $0xa8] sm:$0xff]
    %v639 = vld [vmem:[%s5 + $0xb0] sm:$0xff]
    %v640 = vld [vmem:[%s5 + $0xb8] sm:$0xff]
    %v642 = vrot.slane %v636, 4
    %643 = vrot.lane.b32.xlu0 %v642, 96
    %v644 = vpop.permute.xlu0 %643
    %v645 = vsel %vm98, %v644, 0
    %647 = vmatpush.msra.mxu0 0.0
    %648 = vmatpush.msra.mxu0 0.0
    %649 = vmatpush.msra.mxu0 0.0
    %650 = vmatpush.msra.mxu0 0.0
    %651 = vmatpush.msra.mxu0 0.0
    %652 = vmatpush.msra.mxu0 0.0
    %653 = vmatpush.msra.mxu0 0.0
    %654 = vmatpush.msra.mxu0 0.0
    %655 = vmatpush.msra.mxu0 0.0
    %656 = vmatpush.msra.mxu0 0.0
    %657 = vmatpush.msra.mxu0 0.0
    %658 = vmatpush.msra.mxu0 0.0
    %659 = vmatpush.msra.mxu0 %v640
    %660 = vmatpush.msra.mxu0 %v639
    %661 = vmatpush.msra.mxu0 %v638
    %662 = vmatpush.msra.mxu0 %v637
    %663 = vmatmul.f32.gmra.mxu0 %v645
    %v664 = vpop.f32.mrf.mxu0
    %v665 = vadd.f32 0.0, %v664
    %666 = vdwg.mxu0
    %v667 = vadd.f32 %v570, %v665
    %668 = vmatpush.msra.mxu0 0.0
    %669 = vmatpush.msra.mxu0 0.0
    %670 = vmatpush.msra.mxu0 0.0
    %671 = vmatpush.msra.mxu0 0.0
    %672 = vmatpush.msra.mxu0 0.0
    %673 = vmatpush.msra.mxu0 0.0
    %674 = vmatpush.msra.mxu0 0.0
    %675 = vmatpush.msra.mxu0 0.0
    %676 = vmatpush.msra.mxu0 0.0
    %677 = vmatpush.msra.mxu0 0.0
    %678 = vmatpush.msra.mxu0 0.0
    %679 = vmatpush.msra.mxu0 0.0
    %680 = vmatpush.msra.mxu0 %v90
    %681 = vmatpush.msra.mxu0 %v89
    %682 = vmatpush.msra.mxu0 %v88
    %683 = vmatpush.msra.mxu0 %v87
    %684 = vmatmul.f32.gmra.mxu0 %v645
    %v685 = vpop.f32.mrf.mxu0
    %v686 = vadd.f32 0.0, %v685
    %687 = vdwg.mxu0
    %v688 = vadd.f32 %v85, %v686
    %v689 = vxor.u32 %v688, 2147483648
    %v690 = vmul.f32 %v689, 1.442695
    %v691 = vpow.pop %v690
    %v692 = vadd.f32 %v691, 1.0
    %v693 = vrcp.pop %v692
    %v694 = vmul.f32 %v692, %v693
    %v695 = vsub.f32 1.0, %v694
    %v696 = vmul.f32 %v693, %v695
    %v697 = vadd.f32 %v693, %v696
    %vm698 = vweird.f32 %v692
    %vm699 = vweird.f32 %v693
    %vm700 = vmor %vm698, %vm699
    %v701 = vsel %vm700, %v693, %v697
    %v702 = vand.u32 2147483647, %v692
    %vm703 = vcmp.eq.f32.partialorder %v702, 8.507059e+37
    %v704 = vand.u32 %v692, 2147483648
    %v705 = vor.u32 1.1754944e-38, %v704
    %v706 = vsel %vm703, %v705, %v701
    %v707 = vmul.f32 1.0, %v706
    %v708 = vadd.f32 %v686, %v143
    %710 = vrot.lane.b32.xlu0 %v708, 64
    %v711 = vpop.permute.xlu0 %710
    %v713 = vmul.f32 %v707, %v711
    %715 = vrot.lane.b32.xlu0 %v713, 64
    %v716 = vpop.permute.xlu0 %715
    %v718 = vadd.f32 %v85, %v716
    %v719 = vtanh.pop %v718
    %v720 = vsub.f32 1.0, %v707
    %722 = vrot.lane.b32.xlu0 %v719, 96
    %v723 = vpop.permute.xlu0 %722
    %v725 = vmul.f32 %v720, %v723
    %v727 = vmul.f32 %v707, %v642
    %v728 = vadd.f32 %v725, %v727
    %v729 = vld [vmem:[%s5 + $0xc0] sm:$0xff]
    %v730 = vld [vmem:[%s5 + $0xc8] sm:$0xff]
    %v731 = vld [vmem:[%s5 + $0xd0] sm:$0xff]
    %v732 = vld [vmem:[%s5 + $0xd8] sm:$0xff]
    %734 = vrot.lane.b32.xlu0 %v728, 96
    %v735 = vpop.permute.xlu0 %734
    %v736 = vsel %vm98, %v735, 0
    %738 = vmatpush.msra.mxu0 0.0
    %739 = vmatpush.msra.mxu0 0.0
    %740 = vmatpush.msra.mxu0 0.0
    %741 = vmatpush.msra.mxu0 0.0
    %742 = vmatpush.msra.mxu0 0.0
    %743 = vmatpush.msra.mxu0 0.0
    %744 = vmatpush.msra.mxu0 0.0
    %745 = vmatpush.msra.mxu0 0.0
    %746 = vmatpush.msra.mxu0 0.0
    %747 = vmatpush.msra.mxu0 0.0
    %748 = vmatpush.msra.mxu0 0.0
    %749 = vmatpush.msra.mxu0 0.0
    %750 = vmatpush.msra.mxu0 %v732
    %751 = vmatpush.msra.mxu0 %v731
    %752 = vmatpush.msra.mxu0 %v730
    %753 = vmatpush.msra.mxu0 %v729
    %754 = vmatmul.f32.gmra.mxu0 %v736
    %v755 = vpop.f32.mrf.mxu0
    %v756 = vadd.f32 0.0, %v755
    %757 = vdwg.mxu0
    %v758 = vadd.f32 %v667, %v756
    %759 = vmatpush.msra.mxu0 0.0
    %760 = vmatpush.msra.mxu0 0.0
    %761 = vmatpush.msra.mxu0 0.0
    %762 = vmatpush.msra.mxu0 0.0
    %763 = vmatpush.msra.mxu0 0.0
    %764 = vmatpush.msra.mxu0 0.0
    %765 = vmatpush.msra.mxu0 0.0
    %766 = vmatpush.msra.mxu0 0.0
    %767 = vmatpush.msra.mxu0 0.0
    %768 = vmatpush.msra.mxu0 0.0
    %769 = vmatpush.msra.mxu0 0.0
    %770 = vmatpush.msra.mxu0 0.0
    %771 = vmatpush.msra.mxu0 %v90
    %772 = vmatpush.msra.mxu0 %v89
    %773 = vmatpush.msra.mxu0 %v88
    %774 = vmatpush.msra.mxu0 %v87
    %775 = vmatmul.f32.gmra.mxu0 %v736
    %v776 = vpop.f32.mrf.mxu0
    %v777 = vadd.f32 0.0, %v776
    %778 = vdwg.mxu0
    %v780 = vrot.slane %v777, 4
    %v782 = vadd.f32 %v85, %v780
    %v783 = vxor.u32 %v782, 2147483648
    %v784 = vmul.f32 %v783, 1.442695
    %v785 = vpow.pop %v784
    %v786 = vadd.f32 %v785, 1.0
    %v787 = vrcp.pop %v786
    %v788 = vmul.f32 %v786, %v787
    %v789 = vsub.f32 1.0, %v788
    %v790 = vmul.f32 %v787, %v789
    %v791 = vadd.f32 %v787, %v790
    %vm792 = vweird.f32 %v786
    %vm793 = vweird.f32 %v787
    %vm794 = vmor %vm792, %vm793
    %v795 = vsel %vm794, %v787, %v791
    %v796 = vand.u32 2147483647, %v786
    %vm797 = vcmp.eq.f32.partialorder %v796, 8.507059e+37
    %v798 = vand.u32 %v786, 2147483648
    %v799 = vor.u32 1.1754944e-38, %v798
    %v800 = vsel %vm797, %v799, %v795
    %v801 = vmul.f32 1.0, %v800
    %v802 = vadd.f32 %v777, %v143
    %v804 = vrot.slane %v802, 4
    %805 = vrot.lane.b32.xlu0 %v804, 64
    %v806 = vpop.permute.xlu0 %805
    %v808 = vmul.f32 %v801, %v806
    %810 = vrot.lane.b32.xlu0 %v808, 64
    %v811 = vpop.permute.xlu0 %810
    %v813 = vadd.f32 %v85, %v811
    %v814 = vtanh.pop %v813
    %v815 = vsub.f32 1.0, %v801
    %817 = vrot.lane.b32.xlu0 %v814, 96
    %v818 = vpop.permute.xlu0 %817
    %v820 = vmul.f32 %v815, %v818
    %v821 = vrot.slane %v728, 4
    %v823 = vmul.f32 %v801, %v821
    %v824 = vadd.f32 %v820, %v823
    %v825 = vld [vmem:[%s5 + $0xe0] sm:$0xff]
    %v826 = vld [vmem:[%s5 + $0xe8] sm:$0xff]
    %v827 = vld [vmem:[%s5 + $0xf0] sm:$0xff]
    %v828 = vld [vmem:[%s5 + $0xf8] sm:$0xff]
    %v830 = vrot.slane %v824, 4
    %831 = vrot.lane.b32.xlu0 %v830, 96
    %v832 = vpop.permute.xlu0 %831
    %v833 = vsel %vm98, %v832, 0
    %835 = vmatpush.msra.mxu0 0.0
    %836 = vmatpush.msra.mxu0 0.0
    %837 = vmatpush.msra.mxu0 0.0
    %838 = vmatpush.msra.mxu0 0.0
    %839 = vmatpush.msra.mxu0 0.0
    %840 = vmatpush.msra.mxu0 0.0
    %841 = vmatpush.msra.mxu0 0.0
    %842 = vmatpush.msra.mxu0 0.0
    %843 = vmatpush.msra.mxu0 0.0
    %844 = vmatpush.msra.mxu0 0.0
    %845 = vmatpush.msra.mxu0 0.0
    %846 = vmatpush.msra.mxu0 0.0
    %847 = vmatpush.msra.mxu0 %v828
    %848 = vmatpush.msra.mxu0 %v827
    %849 = vmatpush.msra.mxu0 %v826
    %850 = vmatpush.msra.mxu0 %v825
    %851 = vmatmul.f32.gmra.mxu0 %v833
    %v852 = vpop.f32.mrf.mxu0
    %v853 = vadd.f32 0.0, %v852
    %854 = vdwg.mxu0
    %v855 = vadd.f32 %v758, %v853
    %vm856 = vcmask 3072
    %857 = vst.msk [vmem:[%s7] sm:$0xf] %vm856, %v855
    %858 = vrot.lane.b32.xlu0 %v824, 96
    %v859 = vpop.permute.xlu0 %858
    %vm861 = vcmask 261124
    %862 = vst.msk [vmem:[#allocation3 - $0x4] sm:$0xf0] %vm861, %v859
    // Predicated region
    $region30: #{neural_network_forward.1} parent=1 // pred_check
      _
    $region31: #{neural_network_forward.1} parent=1 // pred_check_branch
      %864 = sbr.rel (0) target = $region33
    $region32: #{neural_network_forward.1} parent=1 // pred_region
      _
    $region33: #{neural_network_forward.1} parent=1 // pred_fallthru
      _
    // Predicated region
    $region34: #{neural_network_forward.1} parent=1 // pred_check
      _
    $region35: #{neural_network_forward.1} parent=1 // pred_check_branch
      %866 = sbr.rel (0) target = $region37
    $region36: #{neural_network_forward.1} parent=1 // pred_region
      %868 = vsyncadd [#allocation4], 0
      %s870 = sshll.u32 [#allocation3], 4
      %s871 = int_to_ptr.vmem [resolvable:$true] %s870
      %s872 = sshll.u32 %s8, 4
      %s873 = int_to_ptr.hbm [resolvable:$true] %s872
      %875 = dma.vmem_to_hbm [thread:$0]  %s871, 64, %s873, [#allocation4]
    $region37: #{neural_network_forward.1} parent=1 // pred_fallthru
      _
    // Predicated region
    $region38: #{neural_network_forward.1} parent=1 // pred_check
      _
    $region39: #{neural_network_forward.1} parent=1 // pred_check_branch
      %877 = sbr.rel (0) target = $region41
    $region40: #{neural_network_forward.1} parent=1 // pred_region
      _
    $region41: #{neural_network_forward.1} parent=1 // pred_fallthru
      _
    // Predicated region
    $region42: #{neural_network_forward.1} parent=1 // pred_check
      _
    $region43: #{neural_network_forward.1} parent=1 // pred_check_branch
      %879 = sbr.rel (0) target = $region45
    $region44: #{neural_network_forward.1} parent=1 // pred_region
      %881 = dma.done [#allocation4], 64
    $region45: #{neural_network_forward.1} parent=1 // pred_fallthru
      _
    %882 = vsyncpa [#allocation4], 1

</llo_original>
